<compile_context>
chip_gen: v5e
topology: v5e:2x2
jax: 0.10.0
libtpu: 0.0.40
codegen_flags: <defaults>
</compile_context>

<pallas_src>
import functools
from types import SimpleNamespace

import numpy as np
import jax
import jax.numpy as jnp
from jax.experimental import pallas as pl
from jax.experimental.pallas import tpu as pltpu


def _round_up(x, m):
    return ((x + m - 1) // m) * m


def _dft_amp_kernel(x_ref, dft_ref, out_ref, *, n_pad, inv_n):
    """Per-batch-tile |rfft| amplitudes, averaged over nodes.

    x_ref   : (B_blk * N_pad, T)  bf16   node-major rows (time last)
    dft_ref : (T, 2 * F_pad)      bf16   fused [cos | -sin] DFT matrix (resident)
    out_ref : (B_blk, F_pad)      f32    mean_n |rfft(x[b, n, :])|   (lane-dense)
    """
    f_pad = out_ref.shape[-1]
    b_blk = out_ref.shape[0]
    # Single fused, lane-aligned MXU matmul: [re | im] = x @ [cos | -sin].
    ri = jnp.dot(x_ref[...], dft_ref[...], preferred_element_type=jnp.float32)
    re = ri[:, :f_pad]                         # lane-tile aligned slice (free)
    im = ri[:, f_pad:]
    amp = jnp.sqrt(re * re + im * im)          # f32 on VPU/EUP
    # Per-batch node mean.  N_pad % 8 == 0, so this reshape is sublane-tile
    # aligned (no relayout copy); the reduction uses VPU/XLU slots that sit
    # idle next to the MXU.  Zero-padded node rows contribute 0, so * (1/N)
    # with the TRUE node count gives the exact node mean.
    amp3 = amp.reshape(b_blk, n_pad, f_pad)
    out_ref[...] = jnp.sum(amp3, axis=1) * inv_n


def _pick_batch_tile(bs, n_pad, seq_len, itemsize=2):
    """Batch tile size for the grid.

    Either the whole batch (bs <= 8: block equals the full dim, always a legal
    BlockSpec) or a multiple of 8 (sublane-aligned output stores, legal block
    rows for any N_pad).  Grown to amortise per-step overhead while keeping
    the double-buffered x block small and the grid >= 2 steps so the DMA
    pipeline / megacore split stays active.
    """
    if bs <= 8:
        return bs
    per_batch = n_pad * seq_len * itemsize
    b_blk = 8
    while (b_blk * 2 * per_batch <= 2 * 1024 * 1024      # <= ~4 MiB double-buffered
           and pl.cdiv(bs, b_blk * 2) >= 2):             # keep >= 2 grid steps
        b_blk *= 2
    return b_blk


def dft_amplitudes(x_enc, compute_dtype=jnp.bfloat16):
    """Returns (amp_mean (bs, F), frequency_list (F,)) where F = T//2 + 1.

    amp_mean[b, f]    == abs(rfft(x, axis=1))[b, f, :].mean()   (mean over nodes)
    frequency_list[f] == abs(rfft(x, axis=1))[:, f, :].mean()   (mean over batch & nodes)
    """
    bs, T, N = x_enc.shape
    F = T // 2 + 1
    F_pad = _round_up(F, 128)        # lane-dense halves; 2*F_pad is 256-aligned
    N_pad = _round_up(N, 8)          # sublane-aligned per-batch row groups

    # Fused DFT matrix [cos | -sin], zero-padded so each half is F_pad wide.
    t = np.arange(T, dtype=np.float64)[:, None]
    f = np.arange(F, dtype=np.float64)[None, :]
    ang = 2.0 * np.pi * t * f / T
    dft_np = np.zeros((T, 2 * F_pad), dtype=np.float32)
    dft_np[:, :F] = np.cos(ang)                 # real part:      sum_t x * cos
    dft_np[:, F_pad:F_pad + F] = -np.sin(ang)   # imaginary part: -sum_t x * sin
    dft = jnp.asarray(dft_np).astype(compute_dtype)

    b_blk = _pick_batch_tile(bs, N_pad, T)
    bs_pad = _round_up(bs, b_blk)

    # Transpose fused with the bf16 cast / zero pad / flatten (one XLA producer
    # pass over x): rows = (batch, node), contraction axis = time, so the
    # kernel does a plain lane-dense matmul with no in-kernel input relayout.
    xT = jnp.transpose(x_enc, (0, 2, 1)).astype(compute_dtype)       # (bs, N, T)
    if bs_pad != bs or N_pad != N:
        xT = jnp.pad(xT, ((0, bs_pad - bs), (0, N_pad - N), (0, 0)))
    x_rows = xT.reshape(bs_pad * N_pad, T)                           # (bs_pad*N_pad, T)

    kernel = functools.partial(_dft_amp_kernel, n_pad=N_pad, inv_n=1.0 / N)

    amp_mean_pad = pl.pallas_call(
        kernel,
        out_shape=jax.ShapeDtypeStruct((bs_pad, F_pad), jnp.float32),
        grid=(bs_pad // b_blk,),
        in_specs=[
            pl.BlockSpec((b_blk * N_pad, T), lambda b: (b, 0)),   # batch-tile rows
            pl.BlockSpec((T, 2 * F_pad), lambda b: (0, 0)),       # resident DFT matrix
        ],
        out_specs=pl.BlockSpec((b_blk, F_pad), lambda b: (b, 0)),
        compiler_params=pltpu.CompilerParams(
            dimension_semantics=("parallel",),                    # megacore on v7x
            vmem_limit_bytes=32 * 1024 * 1024,
        ),
    )(x_rows, dft)

    amp_mean = amp_mean_pad[:bs, :F]                 # drop batch + lane padding
    frequency_list = jnp.mean(amp_mean, axis=0)      # tiny; wrapper-side
    return amp_mean, frequency_list


def FFT_for_Period(x, k=2):
    amp_mean, frequency_list = dft_amplitudes(x)
    frequency_list = frequency_list.at[0].set(0.0)   # drop DC, like PyTorch
    _, top_list = jax.lax.top_k(frequency_list, k)
    # TODO(synk): this host sync is inherent to the data-dependent reshapes below
    # (PyTorch does .detach().cpu().numpy() too); it caps end-to-end throughput.
    top_list = np.asarray(jax.device_get(top_list))
    # Guard the degenerate case where top_k returns the zeroed DC index as a
    # filler (k close to F); PyTorch would divide by zero here.
    top_list = np.where(top_list == 0, 1, top_list)
    period = x.shape[1] // top_list
    return period, amp_mean[:, top_list]


class MutiScaleBlock:
    """JAX/Pallas port of the PyTorch MutiScaleBlock (no learnable params)."""

    def __init__(self, configs):
        self.configs = configs
        self.seq_len = configs.seq_len
        self.k = configs.top_k

    def forward(self, x_enc):
        bs, dimension, num_nodes = x_enc.shape
        scale_list, scale_weight = FFT_for_Period(x_enc, self.k)
        scale_sizes = []
        scale_nums = []
        for i in range(self.k):
            scale = int(scale_list[i])
            if self.seq_len % scale != 0:
                length = (self.seq_len // scale + 1) * scale
                padding = jnp.zeros(
                    (x_enc.shape[0], length - self.seq_len, x_enc.shape[2]),
                    dtype=x_enc.dtype,
                )
                out = jnp.concatenate([x_enc, padding], axis=1)
            else:
                length = self.seq_len
                out = x_enc
            scale_num = length // scale
            out = out.reshape(bs, length // scale, scale, num_nodes)
            scale_nums.append(scale_num)
            scale_sizes.append(out)
        return scale_list, scale_sizes, scale_nums


if __name__ == "__main__":
    configs = SimpleNamespace(
        num_nodes=8, seq_len=16, pred_len=4, top_k=2, d_model=32, conv_out=8,
        lstmhidden_dim=16, lstmout_dim=16, conv_kernel=3, hidden_dim=32,
        time_denpen_len=4, num_windows=2, moving_windows=[2, 2], stride=[1, 1],
        decay=0.9, pooling_choice="mean",
    )

    key = jax.random.PRNGKey(0)
    bs, seq_len, num_nodes = 2, configs.seq_len, configs.num_nodes
    x_enc = jax.random.normal(key, (bs, seq_len, num_nodes), dtype=jnp.float32)

    # --- sanity check of the Pallas DFT against jnp.fft.rfft ---
    # Tolerance reflects bf16 matmul inputs (f32 accumulation); well within the
    # separation between distinct spectral peaks, so top-k ranking is stable.
    amp_mean_k, freq_k = dft_amplitudes(x_enc)
    jax.block_until_ready(amp_mean_k)
    xf_ref = jnp.fft.rfft(x_enc, axis=1)
    freq_ref = jnp.abs(xf_ref).mean(0).mean(-1)
    amp_mean_ref = jnp.abs(xf_ref).mean(-1)
    np.testing.assert_allclose(np.asarray(freq_k), np.asarray(freq_ref),
                               rtol=3e-2, atol=3e-2)
    np.testing.assert_allclose(np.asarray(amp_mean_k), np.asarray(amp_mean_ref),
                               rtol=3e-2, atol=3e-2)

    # --- run the module forward ---
    block = MutiScaleBlock(configs)
    scale_list, scale_sizes, scale_nums = block.forward(x_enc)

    for s in scale_sizes:
        jax.block_until_ready(s)

    assert len(scale_sizes) == configs.top_k
    for i in range(configs.top_k):
        scale = int(scale_list[i])
        assert scale_sizes[i].shape == (bs, scale_nums[i], scale, num_nodes)

    print("KERNEL_OK")
</pallas_src>

<mosaic_0001>
module attributes {stable_mosaic.version = 11 : i64} {
  func.func @_dft_amp_kernel(%arg0: i32, %arg1: memref<16x16xbf16, #tpu.memory_space<vmem>>, %arg2: memref<16x256xbf16, #tpu.memory_space<vmem>>, %arg3: memref<2x128xf32, #tpu.memory_space<vmem>>) attributes {dimension_semantics = [#tpu.dimension_semantics<parallel>], iteration_bounds = array<i64: 1>, scalar_prefetch = 0 : i64, scratch_operands = 0 : i64, tpu.core_type = #tpu.core_type<tc>, window_params = [{transform_indices = @transform_0, window_bounds = array<i64: 16, 16>}, {pipeline_mode = #tpu.pipeline_mode<synchronous>, transform_indices = @transform_1, window_bounds = array<i64: 16, 256>}, {transform_indices = @transform_2, window_bounds = array<i64: 2, 128>}]} {
    %c0 = arith.constant 0 : index
    %c0_0 = arith.constant 0 : index
    %0 = vector.load %arg1[%c0, %c0_0] : memref<16x16xbf16, #tpu.memory_space<vmem>>, vector<16x16xbf16>
    %c0_1 = arith.constant 0 : index
    %c0_2 = arith.constant 0 : index
    %1 = vector.load %arg2[%c0_1, %c0_2] : memref<16x256xbf16, #tpu.memory_space<vmem>>, vector<16x256xbf16>
    %cst = arith.constant dense<0.000000e+00> : vector<16x256xf32>
    %2 = tpu.matmul %0, %1, %cst {dimension_numbers = #tpu.dot_dimension_numbers<[1], [0], [0], [1], [0, 0, 1, 1], [], []>} : vector<16x16xbf16>, vector<16x256xbf16>, vector<16x256xf32> -> vector<16x256xf32>
    %3 = vector.extract_strided_slice %2 {offsets = [0, 0], sizes = [16, 128], strides = [1, 1]} : vector<16x256xf32> to vector<16x128xf32>
    %4 = vector.extract_strided_slice %2 {offsets = [0, 128], sizes = [16, 128], strides = [1, 1]} : vector<16x256xf32> to vector<16x128xf32>
    %5 = arith.mulf %3, %3 : vector<16x128xf32>
    %6 = arith.mulf %4, %4 : vector<16x128xf32>
    %7 = arith.addf %5, %6 : vector<16x128xf32>
    %8 = math.sqrt %7 : vector<16x128xf32>
    %9 = vector.shape_cast %8 : vector<16x128xf32> to vector<2x8x128xf32>
    %cst_3 = arith.constant dense<0.000000e+00> : vector<2x128xf32>
    %10 = vector.multi_reduction <add>, %9, %cst_3 [1] : vector<2x8x128xf32> to vector<2x128xf32>
    %cst_4 = arith.constant 1.250000e-01 : f32
    %11 = vector.broadcast %cst_4 : f32 to vector<2x128xf32>
    %12 = arith.mulf %10, %11 : vector<2x128xf32>
    %c0_5 = arith.constant 0 : index
    %c0_6 = arith.constant 0 : index
    %13 = vector.load %arg3[%c0_5, %c0_6] : memref<2x128xf32, #tpu.memory_space<vmem>>, vector<2x128xf32>
    tpu.vector_store %arg3[%c0_5, %c0_6], %12 {strides = array<i32>} : memref<2x128xf32, #tpu.memory_space<vmem>>, vector<2x128xf32>,
    return
  }
  func.func @transform_0(%arg0: i32) -> (i32, i32) {
    %c0_i32 = arith.constant 0 : i32
    %c0_i32_0 = arith.constant 0 : i32
    return %arg0, %c0_i32 : i32, i32
  }
  func.func @transform_1(%arg0: i32) -> (i32, i32) {
    %c0_i32 = arith.constant 0 : i32
    %c0_i32_0 = arith.constant 0 : i32
    %c0_i32_1 = arith.constant 0 : i32
    return %c0_i32, %c0_i32_0 : i32, i32
  }
  func.func @transform_2(%arg0: i32) -> (i32, i32) {
    %c0_i32 = arith.constant 0 : i32
    %c0_i32_0 = arith.constant 0 : i32
    return %arg0, %c0_i32 : i32, i32
  }
}

</mosaic_0001>

<llo_original>
// kernel: tpu_custom_call.1
$region0: #{tpu_custom_call.1}
  #allocation0 [shape = 'u32[]', space=smem, size = 0x4, offset = 0x4, fixed_abs, tag = 'smem constant byte address 0x4 - core index']
  #allocation1 [shape = 'u32[72,128]{1,0:T(1,128)}', space=vmem, size = 0x9000, scoped, tag = 'internal scratch']
  %s0 = inlined_call_operand.hbm [shape: bf16[16,16], index: 0, kind: input, shape index: {}]
  %s1 = inlined_call_operand.hbm [shape: bf16[16,256], index: 1, kind: input, shape index: {}]
  %s2 = inlined_call_operand.hbm [shape: f32[2,128], index: 2, kind: output, shape index: {}]
  %s3 = sld [smem:[#allocation0]]
  $region26: #{tpu_custom_call.1} parent=0
    _
  %s5 = ssub.s32 1, %s3
  %s6 = scalar_select 0, %s5, %s3
  $region1: #{tpu_custom_call.1} parent=0
    #allocation2 [shape = 'u8[4096]{0}', space=vmem, size = 0x1000, scoped, tag = 'input window, operand 0, single buffered']
    #allocation3 [shape = 's32[1]{0}', space=sflag, size = 0x4, scoped, tag = 'scoped memory for tpu_custom_call.1']
    #allocation4 [shape = 's32[1]{0}', space=sflag, size = 0x4, scoped, tag = 'scoped memory for tpu_custom_call.1']
    #allocation5 [shape = 'u8[8192]{0}', space=vmem, size = 0x2000, scoped, tag = 'input window, operand 1, single buffered']
    #allocation6 [shape = 's32[1]{0}', space=sflag, size = 0x4, scoped, tag = 'scoped memory for tpu_custom_call.1']
    #allocation7 [shape = 'u8[1024]{0}', space=vmem, size = 0x400, scoped, tag = 'output window, operand 0, single buffered']
    %7 = vsyncpa [#allocation3], 0
    %8 = vsyncpa [#allocation6], 0
    %9 = vsyncpa [#allocation4], 0
    // Predicated region
    $region2: #{tpu_custom_call.1} parent=1 // pred_check
      _
    $region3: #{tpu_custom_call.1} parent=1 // pred_check_branch
      %11 = sbr.rel (0) target = $region5
    $region4: #{tpu_custom_call.1} parent=1 // pred_region
      %13 = vsyncadd [#allocation3], 0
      %s14 = sshll.u32 %s0, 4
      %s15 = int_to_ptr.hbm [resolvable:$true] %s14
      %s16 = sshll.u32 [#allocation2], 4
      %s17 = int_to_ptr.vmem [resolvable:$true] %s16
      %22 = dma.hbm_to_vmem [thread:$0]  %s15, 128, %s17, [#allocation3], 64, 64, 4
    $region5: #{tpu_custom_call.1} parent=1 // pred_fallthru
      _
    // Predicated region
    $region6: #{tpu_custom_call.1} parent=1 // pred_check
      _
    $region7: #{tpu_custom_call.1} parent=1 // pred_check_branch
      %24 = sbr.rel (0) target = $region9
    $region8: #{tpu_custom_call.1} parent=1 // pred_region
      %26 = vsyncadd [#allocation6], 0
      %s27 = sshll.u32 %s1, 4
      %s28 = int_to_ptr.hbm [resolvable:$true] %s27
      %s29 = sshll.u32 [#allocation5], 4
      %s30 = int_to_ptr.vmem [resolvable:$true] %s29
      %35 = dma.hbm_to_vmem [thread:$0]  %s28, 256, %s30, [#allocation6], 128, 128, 8
    $region9: #{tpu_custom_call.1} parent=1 // pred_fallthru
      _
    // Predicated region
    $region10: #{tpu_custom_call.1} parent=1 // pred_check
      _
    $region11: #{tpu_custom_call.1} parent=1 // pred_check_branch
      %37 = sbr.rel (0) target = $region13
    $region12: #{tpu_custom_call.1} parent=1 // pred_region
      %39 = dma.done [#allocation3], 128
    $region13: #{tpu_custom_call.1} parent=1 // pred_fallthru
      _
    // Predicated region
    $region14: #{tpu_custom_call.1} parent=1 // pred_check
      _
    $region15: #{tpu_custom_call.1} parent=1 // pred_check_branch
      %41 = sbr.rel (0) target = $region17
    $region16: #{tpu_custom_call.1} parent=1 // pred_region
      %43 = dma.done [#allocation6], 256
    $region17: #{tpu_custom_call.1} parent=1 // pred_fallthru
      _
    %v45 = vld [vmem:[#allocation2] sm:$0xf]
    %v46 = vld [vmem:[#allocation2 + $0x4] sm:$0xf]
    %v47 = vld [vmem:[#allocation5] sm:$0xff]
    %v48 = vld [vmem:[#allocation5 + $0x8] sm:$0xff]
    %v51 = vunpack.c.l.b16 %v45
    %v52 = vunpack.c.l.b16 %v46
    %v53 = vpack.c.b16 %v52, %v51
    %v56 = vunpack.c.l.b16 %v47
    %v57 = vunpack.c.h.b16 %v47
    %v58 = vunpack.c.l.b16 %v48
    %v59 = vunpack.c.h.b16 %v48
    %v60 = vpack.c.b16 %v58, %v56
    %v61 = vpack.c.b16 %v59, %v57
    %vm64 = vcmask 130048
    %v66 = vsel %vm64, %v53, 0
    %68 = vmatpush.bf16.msra.mxu0 0
    %69 = vmatpush.bf16.msra.mxu0 0
    %70 = vmatpush.bf16.msra.mxu0 0
    %71 = vmatpush.bf16.msra.mxu0 0
    %72 = vmatpush.bf16.msra.mxu0 0
    %73 = vmatpush.bf16.msra.mxu0 0
    %74 = vmatpush.bf16.msra.mxu0 0
    %75 = vmatpush.bf16.msra.mxu0 %v60
    %76 = vmatmul.bf16.gmra.mxu0 %v66
    %v77 = vpop.f32.mrf.mxu0
    %v78 = vadd.f32 0.0, %v77
    %v79 = vpop.f32.mrf.mxu0
    %v80 = vadd.f32 0.0, %v79
    %81 = vdwg.mxu0
    %82 = vmatpush.bf16.msra.mxu0 0
    %83 = vmatpush.bf16.msra.mxu0 0
    %84 = vmatpush.bf16.msra.mxu0 0
    %85 = vmatpush.bf16.msra.mxu0 0
    %86 = vmatpush.bf16.msra.mxu0 0
    %87 = vmatpush.bf16.msra.mxu0 0
    %88 = vmatpush.bf16.msra.mxu0 0
    %89 = vmatpush.bf16.msra.mxu0 %v61
    %90 = vmatmul.bf16.gmra.mxu0 %v66
    %v91 = vpop.f32.mrf.mxu0
    %v92 = vadd.f32 0.0, %v91
    %v93 = vpop.f32.mrf.mxu0
    %v94 = vadd.f32 0.0, %v93
    %95 = vdwg.mxu0
    %v96 = vmul.f32 %v78, %v78
    %v97 = vmul.f32 %v80, %v80
    %v98 = vmul.f32 %v92, %v92
    %v99 = vmul.f32 %v94, %v94
    %v100 = vadd.f32 %v96, %v98
    %v101 = vadd.f32 %v97, %v99
    %v102 = vrsqrt.pop %v100
    %v103 = vmul.f32 %v102, %v100
    %v104 = vmul.f32 %v103, %v102
    %v105 = vmul.f32 0.5, %v104
    %v106 = vsub.f32 1.5, %v105
    %v107 = vmul.f32 %v102, %v106
    %v108 = vmul.f32 %v100, %v107
    %vm109 = vcmp.eq.f32.partialorder %v100, inf
    %v110 = vsel %vm109, %v100, %v108
    %vm111 = vcmp.eq.f32.partialorder %v100, 0.0
    %v112 = vand.u32 %v100, 2147483648
    %v113 = vsel %vm111, %v112, %v110
    %v114 = vrsqrt.pop %v101
    %v115 = vmul.f32 %v114, %v101
    %v116 = vmul.f32 %v115, %v114
    %v117 = vmul.f32 0.5, %v116
    %v118 = vsub.f32 1.5, %v117
    %v119 = vmul.f32 %v114, %v118
    %v120 = vmul.f32 %v101, %v119
    %vm121 = vcmp.eq.f32.partialorder %v101, inf
    %v122 = vsel %vm121, %v101, %v120
    %vm123 = vcmp.eq.f32.partialorder %v101, 0.0
    %v124 = vand.u32 %v101, 2147483648
    %v125 = vsel %vm123, %v124, %v122
    %v126 = vrot.slane %v113, 4
    %v127 = vadd.f32 %v113, %v126
    %v128 = vrot.slane %v127, 2
    %v129 = vadd.f32 %v127, %v128
    %v130 = vrot.slane %v129, 1
    %v131 = vadd.f32 %v129, %v130
    %v132 = vrot.slane %v125, 4
    %v133 = vadd.f32 %v125, %v132
    %v134 = vrot.slane %v133, 2
    %v135 = vadd.f32 %v133, %v134
    %v136 = vrot.slane %v135, 1
    %v137 = vadd.f32 %v135, %v136
    %v138 = vmul.f32 %v131, 0.125
    %v139 = vmul.f32 %v137, 0.125
    %vm142 = vcmask 1041409
    %v143 = vsel %vm142, %v139, %v138
    %145 = vst [vmem:[#allocation7] sm:$0x3] %v143
    // Predicated region
    $region18: #{tpu_custom_call.1} parent=1 // pred_check
      _
    $region19: #{tpu_custom_call.1} parent=1 // pred_check_branch
      %147 = sbr.rel (0) target = $region21
    $region20: #{tpu_custom_call.1} parent=1 // pred_region
      %149 = vsyncadd [#allocation4], 0
      %s151 = sshll.u32 [#allocation7], 4
      %s152 = int_to_ptr.vmem [resolvable:$true] %s151
      %s153 = sshll.u32 %s2, 4
      %s154 = int_to_ptr.hbm [resolvable:$true] %s153
      %156 = dma.vmem_to_hbm [thread:$0]  %s152, 32, %s154, [#allocation4]
    $region21: #{tpu_custom_call.1} parent=1 // pred_fallthru
      _
    // Predicated region
    $region22: #{tpu_custom_call.1} parent=1 // pred_check
      _
    $region23: #{tpu_custom_call.1} parent=1 // pred_check_branch
      %158 = sbr.rel (0) target = $region25
    $region24: #{tpu_custom_call.1} parent=1 // pred_region
      %160 = dma.done [#allocation4], 32
    $region25: #{tpu_custom_call.1} parent=1 // pred_fallthru
      _
    %161 = vsyncpa [#allocation3], 1
    %162 = vsyncpa [#allocation6], 1
    %163 = vsyncpa [#allocation4], 1

</llo_original>
